<compile_context>
chip_gen: v7x
topology: tpu7x:2x2x1
jax: 0.10.0
libtpu: 0.0.40
codegen_flags: <defaults>
</compile_context>

<pallas_src>
import functools

import jax
import jax.numpy as jnp
from jax.experimental import pallas as pl
from jax.experimental.pallas import tpu as pltpu


HIDDEN = 512
LANE = 128
NEG_BIG = -1e30  # acts as -inf for padded columns; exp() underflows to 0 in f32


def _round_up(x, m):
    return (x + m - 1) // m * m


# ----------------------------- kernel ---------------------------------------

def _policy_kernel(x_ref, w1_ref, b1_ref, wc_ref, bc_ref, out_ref,
                   *, branch_starts, branch_pads):
    # x_ref : (TB, F)   bf16     w1_ref: (F, 512)      bf16
    # b1_ref: (1, 512)  f32      wc_ref: (512, Tpad)   bf16
    # bc_ref: (1, Tpad) f32      out_ref: (TB, Tpad)   f32
    x = x_ref[...]

    # Linear(in_features -> 512): bf16 MXU matmul, f32 accumulate; ReLU in f32.
    h = jnp.dot(x, w1_ref[...], preferred_element_type=jnp.float32) + b1_ref[...]
    h = jnp.maximum(h, 0.0)

    # All policy branches fused into ONE MXU matmul: (TB, 512) @ (512, Tpad).
    # Padded columns carry bias NEG_BIG -> excluded from max, exp -> 0.
    logits = jnp.dot(h.astype(wc_ref.dtype), wc_ref[...],
                     preferred_element_type=jnp.float32) + bc_ref[...]

    # Per-branch log-softmax on lane-aligned 128-wide slabs, stored directly
    # into lane-aligned out_ref slices (static slices, unrolled at trace time,
    # no cross-tile relayout).
    for start, width in zip(branch_starts, branch_pads):
        l = logits[:, start:start + width]
        m = jnp.max(l, axis=-1, keepdims=True)
        lse = m + jnp.log(jnp.sum(jnp.exp(l - m), axis=-1, keepdims=True))
        out_ref[:, start:start + width] = (l - lse).astype(out_ref.dtype)


# --------------------------- parameter prep (one-time) ----------------------

def prepare_policy_params(w1, b1, branch_ws, branch_bs,
                          *, compute_dtype=jnp.bfloat16):
    """One-time prep: concat branches into a lane-aligned slab, cast MXU
    operands to bf16, keep biases f32.  Call once, reuse across forwards."""
    branch_sizes = tuple(int(w.shape[1]) for w in branch_ws)
    branch_pads = tuple(_round_up(n, LANE) for n in branch_sizes)
    total_pad = sum(branch_pads)

    wc = jnp.zeros((HIDDEN, total_pad), jnp.float32)
    bc = jnp.full((1, total_pad), NEG_BIG, jnp.float32)
    branch_starts = []
    start = 0
    for w, b, n, npad in zip(branch_ws, branch_bs, branch_sizes, branch_pads):
        branch_starts.append(start)
        wc = wc.at[:, start:start + n].set(w.astype(jnp.float32))
        bc = bc.at[:, start:start + n].set(b.astype(jnp.float32).reshape(1, -1))
        start += npad

    return dict(
        w1=w1.astype(compute_dtype),                 # (F, 512)   bf16
        b1=b1.reshape(1, -1).astype(jnp.float32),    # (1, 512)   f32
        wc=wc.astype(compute_dtype),                 # (512, Tp)  bf16
        bc=bc,                                       # (1, Tp)    f32
        branch_sizes=branch_sizes,
        branch_pads=branch_pads,
        branch_starts=tuple(branch_starts),
        compute_dtype=compute_dtype,
    )


# ------------------------------- forward ------------------------------------

def multi_discrete_action_policy(x, params, *, batch_tile=512):
    """Returns a list of normalized per-branch logits (one per action dim)."""
    w1, b1 = params["w1"], params["b1"]
    wc, bc = params["wc"], params["bc"]
    branch_sizes = params["branch_sizes"]
    branch_pads = params["branch_pads"]
    branch_starts = params["branch_starts"]
    compute_dtype = params["compute_dtype"]

    B, F = x.shape
    total_pad = int(wc.shape[1])

    # Batch tile: sublane multiple (16 for bf16 inputs), batch padded to tile.
    sublane = 16 if compute_dtype == jnp.bfloat16 else 8
    tb = min(batch_tile, _round_up(B, sublane))
    tb = max(sublane, _round_up(tb, sublane))
    b_pad = _round_up(B, tb)

    # Cast first (halves any pad work / DMA bytes), pad only if needed.
    x = x.astype(compute_dtype)
    if b_pad != B:
        x = jnp.pad(x, ((0, b_pad - B), (0, 0)))

    kernel = functools.partial(_policy_kernel,
                               branch_starts=branch_starts,
                               branch_pads=branch_pads)

    out = pl.pallas_call(
        kernel,
        out_shape=jax.ShapeDtypeStruct((b_pad, total_pad), jnp.float32),
        grid=(b_pad // tb,),
        in_specs=[
            pl.BlockSpec((tb, F), lambda i: (i, 0)),               # x: batch-tiled
            pl.BlockSpec((F, HIDDEN), lambda i: (0, 0)),           # VMEM-resident
            pl.BlockSpec((1, HIDDEN), lambda i: (0, 0)),
            pl.BlockSpec((HIDDEN, total_pad), lambda i: (0, 0)),
            pl.BlockSpec((1, total_pad), lambda i: (0, 0)),
        ],
        out_specs=pl.BlockSpec((tb, total_pad), lambda i: (i, 0)),
        compiler_params=pltpu.CompilerParams(
            dimension_semantics=("parallel",),
            vmem_limit_bytes=32 * 1024 * 1024,
        ),
    )(x, w1, b1, wc, bc)

    # Glue: slice the lane-padded slab back into per-branch normalized logits.
    return [out[:B, s:s + n] for s, n in zip(branch_starts, branch_sizes)]


# ---------------- deterministic parameter init (matches module __init__) ----

def _orthogonal(key, shape, gain):
    """torch.nn.init.orthogonal_ equivalent; shape = (out_features, in_features)."""
    rows, cols = shape
    flat = jax.random.normal(key, (rows, cols), dtype=jnp.float32)
    if rows < cols:
        flat = flat.T
    q, r = jnp.linalg.qr(flat)
    q = q * jnp.sign(jnp.diag(r))
    if rows < cols:
        q = q.T
    return gain * q


def _bias_init(key, fan_in, out_features):
    bound = 1.0 / jnp.sqrt(fan_in)
    return jax.random.uniform(key, (out_features,), jnp.float32, -bound, bound)


if __name__ == "__main__":
    B = 4
    in_features = 32
    action_space_shape = (3, 5)

    root = jax.random.PRNGKey(0)
    keys = jax.random.split(root, 2 + 2 * len(action_space_shape) + 1)

    # Linear(in_features, 512), orthogonal gain sqrt(2); stored transposed.
    w1 = _orthogonal(keys[0], (HIDDEN, in_features), jnp.sqrt(2.0)).T   # (F, 512)
    b1 = _bias_init(keys[1], in_features, HIDDEN)                       # (512,)

    # Policy branches: Linear(512, n), orthogonal gain sqrt(0.01); transposed.
    branch_ws, branch_bs = [], []
    for i, n in enumerate(action_space_shape):
        wk = keys[2 + 2 * i]
        bk = keys[3 + 2 * i]
        branch_ws.append(_orthogonal(wk, (n, HIDDEN), jnp.sqrt(0.01)).T)  # (512, n)
        branch_bs.append(_bias_init(bk, HIDDEN, n))                        # (n,)

    x = jax.random.normal(keys[-1], (B, in_features), dtype=jnp.float32)

    # One-time parameter prep (concat + pad + bf16 cast), then forward.
    params = prepare_policy_params(w1, b1, branch_ws, branch_bs)
    logits_list = multi_discrete_action_policy(x, params)
    logits_list = [jax.block_until_ready(l) for l in logits_list]

    # Sanity check vs a pure-JAX reference that mimics the kernel's bf16 MXU
    # inputs / f32 accumulation, plus the f32 ideal with a looser tolerance.
    h_ref = jnp.maximum(
        jnp.dot(x.astype(jnp.bfloat16), w1.astype(jnp.bfloat16),
                preferred_element_type=jnp.float32) + b1, 0.0)
    h_f32 = jnp.maximum(x @ w1 + b1, 0.0)
    for l, wb, bb in zip(logits_list, branch_ws, branch_bs):
        raw = jnp.dot(h_ref.astype(jnp.bfloat16), wb.astype(jnp.bfloat16),
                      preferred_element_type=jnp.float32) + bb
        ref = raw - jax.scipy.special.logsumexp(raw, axis=-1, keepdims=True)
        raw32 = h_f32 @ wb + bb
        ref32 = raw32 - jax.scipy.special.logsumexp(raw32, axis=-1, keepdims=True)
        assert jnp.allclose(l, ref, atol=2e-3), "mismatch vs bf16-path reference"
        assert jnp.allclose(l, ref32, atol=5e-2), "mismatch vs f32 reference"
        assert jnp.allclose(jnp.sum(jnp.exp(l), axis=-1), 1.0, atol=1e-4)

    print("KERNEL_OK")
</pallas_src>

<mosaic_0001>
module attributes {stable_mosaic.version = 11 : i64} {
  func.func @_policy_kernel(%arg0: i32, %arg1: memref<16x32xbf16, #tpu.memory_space<vmem>>, %arg2: memref<32x512xbf16, #tpu.memory_space<vmem>>, %arg3: memref<1x512xf32, #tpu.memory_space<vmem>>, %arg4: memref<512x256xbf16, #tpu.memory_space<vmem>>, %arg5: memref<1x256xf32, #tpu.memory_space<vmem>>, %arg6: memref<16x256xf32, #tpu.memory_space<vmem>>) attributes {dimension_semantics = [#tpu.dimension_semantics<parallel>], iteration_bounds = array<i64: 1>, scalar_prefetch = 0 : i64, scratch_operands = 0 : i64, tpu.core_type = #tpu.core_type<tc>, window_params = [{transform_indices = @transform_0, window_bounds = array<i64: 16, 32>}, {pipeline_mode = #tpu.pipeline_mode<synchronous>, transform_indices = @transform_1, window_bounds = array<i64: 32, 512>}, {pipeline_mode = #tpu.pipeline_mode<synchronous>, transform_indices = @transform_2, window_bounds = array<i64: 1, 512>}, {pipeline_mode = #tpu.pipeline_mode<synchronous>, transform_indices = @transform_3, window_bounds = array<i64: 512, 256>}, {pipeline_mode = #tpu.pipeline_mode<synchronous>, transform_indices = @transform_4, window_bounds = array<i64: 1, 256>}, {transform_indices = @transform_5, window_bounds = array<i64: 16, 256>}]} {
    %c0 = arith.constant 0 : index
    %c0_0 = arith.constant 0 : index
    %0 = vector.load %arg1[%c0, %c0_0] : memref<16x32xbf16, #tpu.memory_space<vmem>>, vector<16x32xbf16>
    %c0_1 = arith.constant 0 : index
    %c0_2 = arith.constant 0 : index
    %1 = vector.load %arg2[%c0_1, %c0_2] : memref<32x512xbf16, #tpu.memory_space<vmem>>, vector<32x512xbf16>
    %cst = arith.constant dense<0.000000e+00> : vector<16x512xf32>
    %2 = tpu.matmul %0, %1, %cst {dimension_numbers = #tpu.dot_dimension_numbers<[1], [0], [0], [1], [0, 0, 1, 1], [], []>} : vector<16x32xbf16>, vector<32x512xbf16>, vector<16x512xf32> -> vector<16x512xf32>
    %c0_3 = arith.constant 0 : index
    %c0_4 = arith.constant 0 : index
    %3 = vector.load %arg3[%c0_3, %c0_4] : memref<1x512xf32, #tpu.memory_space<vmem>>, vector<1x512xf32>
    %4 = vector.broadcast %3 : vector<1x512xf32> to vector<16x512xf32>
    %5 = arith.addf %2, %4 : vector<16x512xf32>
    %cst_5 = arith.constant 0.000000e+00 : f32
    %6 = vector.broadcast %cst_5 : f32 to vector<16x512xf32>
    %7 = arith.maximumf %5, %6 : vector<16x512xf32>
    %8 = arith.truncf %7 : vector<16x512xf32> to vector<16x512xbf16>
    %c0_6 = arith.constant 0 : index
    %c0_7 = arith.constant 0 : index
    %9 = vector.load %arg4[%c0_6, %c0_7] : memref<512x256xbf16, #tpu.memory_space<vmem>>, vector<512x256xbf16>
    %cst_8 = arith.constant dense<0.000000e+00> : vector<16x256xf32>
    %10 = tpu.matmul %8, %9, %cst_8 {dimension_numbers = #tpu.dot_dimension_numbers<[1], [0], [0], [1], [0, 0, 1, 1], [], []>} : vector<16x512xbf16>, vector<512x256xbf16>, vector<16x256xf32> -> vector<16x256xf32>
    %c0_9 = arith.constant 0 : index
    %c0_10 = arith.constant 0 : index
    %11 = vector.load %arg5[%c0_9, %c0_10] : memref<1x256xf32, #tpu.memory_space<vmem>>, vector<1x256xf32>
    %12 = vector.broadcast %11 : vector<1x256xf32> to vector<16x256xf32>
    %13 = arith.addf %10, %12 : vector<16x256xf32>
    %14 = vector.extract_strided_slice %13 {offsets = [0, 0], sizes = [16, 128], strides = [1, 1]} : vector<16x256xf32> to vector<16x128xf32>
    %cst_11 = arith.constant dense<0xFF800000> : vector<16xf32>
    %15 = vector.multi_reduction <maximumf>, %14, %cst_11 [1] : vector<16x128xf32> to vector<16xf32>
    %16 = vector.shape_cast %15 : vector<16xf32> to vector<16x1xf32>
    %17 = vector.broadcast %16 : vector<16x1xf32> to vector<16x128xf32>
    %18 = arith.subf %14, %17 : vector<16x128xf32>
    %19 = math.exp %18 : vector<16x128xf32>
    %cst_12 = arith.constant dense<0.000000e+00> : vector<16xf32>
    %20 = vector.multi_reduction <add>, %19, %cst_12 [1] : vector<16x128xf32> to vector<16xf32>
    %21 = vector.shape_cast %20 : vector<16xf32> to vector<16x1xf32>
    %22 = math.log %21 : vector<16x1xf32>
    %23 = arith.addf %16, %22 : vector<16x1xf32>
    %24 = vector.broadcast %23 : vector<16x1xf32> to vector<16x128xf32>
    %25 = arith.subf %14, %24 : vector<16x128xf32>
    %c0_13 = arith.constant 0 : index
    %c0_14 = arith.constant 0 : index
    %26 = vector.load %arg6[%c0_13, %c0_14] : memref<16x256xf32, #tpu.memory_space<vmem>>, vector<16x128xf32>
    tpu.vector_store %arg6[%c0_13, %c0_14], %25 {strides = array<i32>} : memref<16x256xf32, #tpu.memory_space<vmem>>, vector<16x128xf32>,
    %27 = vector.extract_strided_slice %13 {offsets = [0, 128], sizes = [16, 128], strides = [1, 1]} : vector<16x256xf32> to vector<16x128xf32>
    %cst_15 = arith.constant dense<0xFF800000> : vector<16xf32>
    %28 = vector.multi_reduction <maximumf>, %27, %cst_15 [1] : vector<16x128xf32> to vector<16xf32>
    %29 = vector.shape_cast %28 : vector<16xf32> to vector<16x1xf32>
    %30 = vector.broadcast %29 : vector<16x1xf32> to vector<16x128xf32>
    %31 = arith.subf %27, %30 : vector<16x128xf32>
    %32 = math.exp %31 : vector<16x128xf32>
    %cst_16 = arith.constant dense<0.000000e+00> : vector<16xf32>
    %33 = vector.multi_reduction <add>, %32, %cst_16 [1] : vector<16x128xf32> to vector<16xf32>
    %34 = vector.shape_cast %33 : vector<16xf32> to vector<16x1xf32>
    %35 = math.log %34 : vector<16x1xf32>
    %36 = arith.addf %29, %35 : vector<16x1xf32>
    %37 = vector.broadcast %36 : vector<16x1xf32> to vector<16x128xf32>
    %38 = arith.subf %27, %37 : vector<16x128xf32>
    %c0_17 = arith.constant 0 : index
    %c128 = arith.constant 128 : index
    %39 = vector.load %arg6[%c0_17, %c128] : memref<16x256xf32, #tpu.memory_space<vmem>>, vector<16x128xf32>
    tpu.vector_store %arg6[%c0_17, %c128], %38 {strides = array<i32>} : memref<16x256xf32, #tpu.memory_space<vmem>>, vector<16x128xf32>,
    return
  }
  func.func @transform_0(%arg0: i32) -> (i32, i32) {
    %c0_i32 = arith.constant 0 : i32
    %c0_i32_0 = arith.constant 0 : i32
    return %arg0, %c0_i32 : i32, i32
  }
  func.func @transform_1(%arg0: i32) -> (i32, i32) {
    %c0_i32 = arith.constant 0 : i32
    %c0_i32_0 = arith.constant 0 : i32
    %c0_i32_1 = arith.constant 0 : i32
    return %c0_i32, %c0_i32_0 : i32, i32
  }
  func.func @transform_2(%arg0: i32) -> (i32, i32) {
    %c0_i32 = arith.constant 0 : i32
    %c0_i32_0 = arith.constant 0 : i32
    %c0_i32_1 = arith.constant 0 : i32
    return %c0_i32, %c0_i32_0 : i32, i32
  }
  func.func @transform_3(%arg0: i32) -> (i32, i32) {
    %c0_i32 = arith.constant 0 : i32
    %c0_i32_0 = arith.constant 0 : i32
    %c0_i32_1 = arith.constant 0 : i32
    return %c0_i32, %c0_i32_0 : i32, i32
  }
  func.func @transform_4(%arg0: i32) -> (i32, i32) {
    %c0_i32 = arith.constant 0 : i32
    %c0_i32_0 = arith.constant 0 : i32
    %c0_i32_1 = arith.constant 0 : i32
    return %c0_i32, %c0_i32_0 : i32, i32
  }
  func.func @transform_5(%arg0: i32) -> (i32, i32) {
    %c0_i32 = arith.constant 0 : i32
    %c0_i32_0 = arith.constant 0 : i32
    return %arg0, %c0_i32 : i32, i32
  }
}

</mosaic_0001>

<llo_original>
// kernel: tpu_custom_call.1
$region0: #{tpu_custom_call.1}
  #allocation0 [shape = 'u32[]', space=smem, size = 0x4, offset = 0x4, fixed_abs, tag = 'smem constant byte address 0x4 - core index']
  #allocation1 [shape = 'u32[144,128]{1,0:T(1,128)}', space=vmem, size = 0x12000, scoped, tag = 'internal scratch']
  %s0 = inlined_call_operand.hbm [shape: bf16[16,32], index: 0, kind: input, shape index: {}]
  %s1 = inlined_call_operand.hbm [shape: bf16[32,512], index: 1, kind: input, shape index: {}]
  %s2 = inlined_call_operand.vmem [shape: f32[1,512], index: 2, kind: input, shape index: {}]
  %s3 = inlined_call_operand.hbm [shape: bf16[512,256], index: 3, kind: input, shape index: {}]
  %s4 = inlined_call_operand.vmem [shape: f32[1,256], index: 4, kind: input, shape index: {}]
  %s5 = inlined_call_operand.hbm [shape: f32[16,256], index: 5, kind: output, shape index: {}]
  %s6 = sld [smem:[#allocation0]]
  $region42: #{tpu_custom_call.1} parent=0
    _
  %s8 = ssub.s32 1, %s6
  %s9 = scalar_select 0, %s8, %s6
  $region1: #{tpu_custom_call.1} parent=0
    #allocation2 [shape = 'u8[4096]{0}', space=vmem, size = 0x1000, scoped, tag = 'input window, operand 0, single buffered']
    #allocation3 [shape = 's32[1]{0}', space=sflag, size = 0x4, scoped, tag = 'scoped memory for tpu_custom_call.1']
    #allocation4 [shape = 's32[1]{0}', space=sflag, size = 0x4, scoped, tag = 'scoped memory for tpu_custom_call.1']
    #allocation5 [shape = 'u8[32768]{0}', space=vmem, size = 0x8000, scoped, tag = 'input window, operand 1, single buffered']
    #allocation6 [shape = 's32[1]{0}', space=sflag, size = 0x4, scoped, tag = 'scoped memory for tpu_custom_call.1']
    #allocation7 [shape = 'u8[262144]{0}', space=vmem, size = 0x40000, scoped, tag = 'input window, operand 3, single buffered']
    #allocation8 [shape = 'u8[16384]{0}', space=vmem, size = 0x4000, scoped, tag = 'output window, operand 0, single buffered']
    %10 = vsyncpa [#allocation3], 0
    %11 = vsyncpa [#allocation6], 0
    %12 = vsyncpa [#allocation4], 0
    // Predicated region
    $region2: #{tpu_custom_call.1} parent=1 // pred_check
      _
    $region3: #{tpu_custom_call.1} parent=1 // pred_check_branch
      %14 = sbr.rel (0) target = $region5
    $region4: #{tpu_custom_call.1} parent=1 // pred_region
      %s16 = ssub.s32 128, 128
      %17 = vsyncadd [#allocation3], %s16
      %s18 = sshll.u32 [#allocation2], 4
      %s19 = int_to_ptr.vmem [resolvable:$true] %s18
      %24 = dma.hbm_to_vmem [thread:$0]  %s0, 128, %s19, [#allocation3], 64, 64, 4
    $region5: #{tpu_custom_call.1} parent=1 // pred_fallthru
      _
    // Predicated region
    $region6: #{tpu_custom_call.1} parent=1 // pred_check
      _
    $region7: #{tpu_custom_call.1} parent=1 // pred_check_branch
      %26 = sbr.rel (0) target = $region9
    $region8: #{tpu_custom_call.1} parent=1 // pred_region
      %s28 = ssub.s32 1024, 1024
      %29 = vsyncadd [#allocation6], %s28
      %s30 = sshll.u32 [#allocation5], 4
      %s31 = int_to_ptr.vmem [resolvable:$true] %s30
      %36 = dma.hbm_to_vmem [thread:$0]  %s1, 1024, %s31, [#allocation6], 256, 256, 16
    $region9: #{tpu_custom_call.1} parent=1 // pred_fallthru
      _
    // Predicated region
    $region10: #{tpu_custom_call.1} parent=1 // pred_check
      _
    $region11: #{tpu_custom_call.1} parent=1 // pred_check_branch
      %38 = sbr.rel (0) target = $region13
    $region12: #{tpu_custom_call.1} parent=1 // pred_region
      _
    $region13: #{tpu_custom_call.1} parent=1 // pred_fallthru
      _
    // Predicated region
    $region14: #{tpu_custom_call.1} parent=1 // pred_check
      _
    $region15: #{tpu_custom_call.1} parent=1 // pred_check_branch
      %40 = sbr.rel (0) target = $region17
    $region16: #{tpu_custom_call.1} parent=1 // pred_region
      %s42 = ssub.s32 8192, 8192
      %43 = vsyncadd [#allocation6], %s42
      %s44 = sshll.u32 [#allocation7], 4
      %s45 = int_to_ptr.vmem [resolvable:$true] %s44
      %50 = dma.hbm_to_vmem [thread:$0]  %s3, 8192, %s45, [#allocation6], 128, 128, 8
    $region17: #{tpu_custom_call.1} parent=1 // pred_fallthru
      _
    // Predicated region
    $region18: #{tpu_custom_call.1} parent=1 // pred_check
      _
    $region19: #{tpu_custom_call.1} parent=1 // pred_check_branch
      %52 = sbr.rel (0) target = $region21
    $region20: #{tpu_custom_call.1} parent=1 // pred_region
      _
    $region21: #{tpu_custom_call.1} parent=1 // pred_fallthru
      _
    // Predicated region
    $region22: #{tpu_custom_call.1} parent=1 // pred_check
      _
    $region23: #{tpu_custom_call.1} parent=1 // pred_check_branch
      %54 = sbr.rel (0) target = $region25
    $region24: #{tpu_custom_call.1} parent=1 // pred_region
      %55 = dma.done [#allocation3], 128
    $region25: #{tpu_custom_call.1} parent=1 // pred_fallthru
      _
    // Predicated region
    $region26: #{tpu_custom_call.1} parent=1 // pred_check
      _
    $region27: #{tpu_custom_call.1} parent=1 // pred_check_branch
      %57 = sbr.rel (0) target = $region29
    $region28: #{tpu_custom_call.1} parent=1 // pred_region
      %58 = dma.done [#allocation6], 1024
    $region29: #{tpu_custom_call.1} parent=1 // pred_fallthru
      _
    // Predicated region
    $region30: #{tpu_custom_call.1} parent=1 // pred_check
      _
    $region31: #{tpu_custom_call.1} parent=1 // pred_check_branch
      %60 = sbr.rel (0) target = $region33
    $region32: #{tpu_custom_call.1} parent=1 // pred_region
      %61 = dma.done [#allocation6], 8192
    $region33: #{tpu_custom_call.1} parent=1 // pred_fallthru
      _
    %v63 = vld [vmem:[#allocation2] sm:$0xf]
    %v64 = vld [vmem:[#allocation2 + $0x4] sm:$0xf]
    %v65 = vld [vmem:[#allocation5] sm:$0xff]
    %v66 = vld [vmem:[#allocation5 + $0x8] sm:$0xff]
    %v67 = vld [vmem:[#allocation5 + $0x10] sm:$0xff]
    %v68 = vld [vmem:[#allocation5 + $0x18] sm:$0xff]
    %v69 = vld [vmem:[#allocation5 + $0x20] sm:$0xff]
    %v70 = vld [vmem:[#allocation5 + $0x28] sm:$0xff]
    %v71 = vld [vmem:[#allocation5 + $0x30] sm:$0xff]
    %v72 = vld [vmem:[#allocation5 + $0x38] sm:$0xff]
    %v73 = vld [vmem:[%s2] sm:$0xf]
    %v75 = vlaneseq
    %v76 = vshrl.u32 %v75, 7
    %v77 = vsub.s32 0, %v76
    %v78 = vrot.slane %v73, %v77
    %v79 = vlaneseq
    %v80 = vshrl.u32 %v79, 7
    %v81 = vsub.s32 1, %v80
    %v82 = vrot.slane %v73, %v81
    %v83 = vlaneseq
    %v84 = vshrl.u32 %v83, 7
    %v85 = vsub.s32 2, %v84
    %v86 = vrot.slane %v73, %v85
    %v87 = vlaneseq
    %v88 = vshrl.u32 %v87, 7
    %v89 = vsub.s32 3, %v88
    %v90 = vrot.slane %v73, %v89
    %v97 = vunpack.c.l.b16 %v63
    %v98 = vunpack.c.l.b16 %v64
    %v99 = vpack.c.b16 %v98, %v97
    %v108 = vunpack.c.l.b16 %v65
    %v109 = vunpack.c.h.b16 %v65
    %v110 = vunpack.c.l.b16 %v66
    %v111 = vunpack.c.h.b16 %v66
    %v112 = vunpack.c.l.b16 %v67
    %v113 = vunpack.c.h.b16 %v67
    %v114 = vunpack.c.l.b16 %v68
    %v115 = vunpack.c.h.b16 %v68
    %v116 = vunpack.c.l.b16 %v69
    %v117 = vunpack.c.h.b16 %v69
    %v118 = vunpack.c.l.b16 %v70
    %v119 = vunpack.c.h.b16 %v70
    %v120 = vunpack.c.l.b16 %v71
    %v121 = vunpack.c.h.b16 %v71
    %v122 = vunpack.c.l.b16 %v72
    %v123 = vunpack.c.h.b16 %v72
    %v124 = vpack.c.b16 %v112, %v108
    %v125 = vpack.c.b16 %v113, %v109
    %v126 = vpack.c.b16 %v114, %v110
    %v127 = vpack.c.b16 %v115, %v111
    %v128 = vpack.c.b16 %v120, %v116
    %v129 = vpack.c.b16 %v121, %v117
    %v130 = vpack.c.b16 %v122, %v118
    %v131 = vpack.c.b16 %v123, %v119
    %vm140 = vcmask 261120
    %v142 = vsel %vm140, %v99, 0
    %144 = vmatprep.subr.bf16.mxu0 %v125
    %145 = vmatpush1.bf16.msra.mxu0 %v124
    %146 = vmatprep.subr.bf16.mxu0 %v129
    %147 = vmatpush1.bf16.msra.mxu0 %v128
    %148 = vmatprep.subr.bf16.mxu0 0
    %149 = vmatpush1.bf16.msra.mxu0 0
    %150 = vmatprep.subr.bf16.mxu0 0
    %151 = vmatpush1.bf16.msra.mxu0 0
    %152 = vmatprep.subr.bf16.mxu0 0
    %153 = vmatpush1.bf16.msra.mxu0 0
    %154 = vmatprep.subr.bf16.mxu0 0
    %155 = vmatpush1.bf16.msra.mxu0 0
    %156 = vmatprep.subr.bf16.mxu0 0
    %157 = vmatpush1.bf16.msra.mxu0 0
    %158 = vmatprep.subr.bf16.mxu0 0
    %159 = vmatpush1.bf16.msra.mxu0 0
    %160 = vmatprep.subr.bf16.mxu0 0
    %161 = vmatpush1.bf16.msra.mxu0 0
    %162 = vmatprep.subr.bf16.mxu0 0
    %163 = vmatpush1.bf16.msra.mxu0 0
    %164 = vmatprep.subr.bf16.mxu0 0
    %165 = vmatpush1.bf16.msra.mxu0 0
    %166 = vmatprep.subr.bf16.mxu0 0
    %167 = vmatpush1.bf16.msra.mxu0 0
    %168 = vmatprep.subr.bf16.mxu0 0
    %169 = vmatpush1.bf16.msra.mxu0 0
    %170 = vmatprep.subr.bf16.mxu0 0
    %171 = vmatpush1.bf16.msra.mxu0 0
    %172 = vmatprep.subr.bf16.mxu0 0
    %173 = vmatpush1.bf16.msra.mxu0 0
    %174 = vmatprep.subr.bf16.mxu0 0
    %175 = vmatpush1.bf16.msra.mxu0 0
    %176 = vmatprep.mubr.bf16.mxu0 0
    %177 = vmatmul.mubr.bf16.gmra.mrb[0].mxu0 %v142
    %v178 = vpop.f32.mrb[0].mxu0
    %v179 = vadd.f32 %v78, %v178
    %v180 = vpop.f32.mrb[0].mxu0
    %v181 = vadd.f32 %v82, %v180
    %v182 = vpop.f32.mrb[0].mxu0
    %v183 = vadd.f32 %v78, %v182
    %v184 = vpop.f32.mrb[0].mxu0
    %v185 = vadd.f32 %v82, %v184
    %186 = vdwg.mxu0
    %187 = vmatprep.subr.bf16.mxu0 %v127
    %188 = vmatpush1.bf16.msra.mxu0 %v126
    %189 = vmatprep.subr.bf16.mxu0 %v131
    %190 = vmatpush1.bf16.msra.mxu0 %v130
    %191 = vmatprep.subr.bf16.mxu0 0
    %192 = vmatpush1.bf16.msra.mxu0 0
    %193 = vmatprep.subr.bf16.mxu0 0
    %194 = vmatpush1.bf16.msra.mxu0 0
    %195 = vmatprep.subr.bf16.mxu0 0
    %196 = vmatpush1.bf16.msra.mxu0 0
    %197 = vmatprep.subr.bf16.mxu0 0
    %198 = vmatpush1.bf16.msra.mxu0 0
    %199 = vmatprep.subr.bf16.mxu0 0
    %200 = vmatpush1.bf16.msra.mxu0 0
    %201 = vmatprep.subr.bf16.mxu0 0
    %202 = vmatpush1.bf16.msra.mxu0 0
    %203 = vmatprep.subr.bf16.mxu0 0
    %204 = vmatpush1.bf16.msra.mxu0 0
    %205 = vmatprep.subr.bf16.mxu0 0
    %206 = vmatpush1.bf16.msra.mxu0 0
    %207 = vmatprep.subr.bf16.mxu0 0
    %208 = vmatpush1.bf16.msra.mxu0 0
    %209 = vmatprep.subr.bf16.mxu0 0
    %210 = vmatpush1.bf16.msra.mxu0 0
    %211 = vmatprep.subr.bf16.mxu0 0
    %212 = vmatpush1.bf16.msra.mxu0 0
    %213 = vmatprep.subr.bf16.mxu0 0
    %214 = vmatpush1.bf16.msra.mxu0 0
    %215 = vmatprep.subr.bf16.mxu0 0
    %216 = vmatpush1.bf16.msra.mxu0 0
    %217 = vmatprep.subr.bf16.mxu0 0
    %218 = vmatpush1.bf16.msra.mxu0 0
    %219 = vmatprep.mubr.bf16.mxu0 0
    %220 = vmatmul.mubr.bf16.gmra.mrb[0].mxu0 %v142
    %v221 = vpop.f32.mrb[0].mxu0
    %v222 = vadd.f32 %v86, %v221
    %v223 = vpop.f32.mrb[0].mxu0
    %v224 = vadd.f32 %v90, %v223
    %v225 = vpop.f32.mrb[0].mxu0
    %v226 = vadd.f32 %v86, %v225
    %v227 = vpop.f32.mrb[0].mxu0
    %v228 = vadd.f32 %v90, %v227
    %229 = vdwg.mxu0
    %v230 = vmax.f32 %v179, 0.0
    %v231 = vmax.f32 %v181, 0.0
    %v232 = vmax.f32 %v222, 0.0
    %v233 = vmax.f32 %v224, 0.0
    %v234 = vmax.f32 %v183, 0.0
    %v235 = vmax.f32 %v185, 0.0
    %v236 = vmax.f32 %v226, 0.0
    %v237 = vmax.f32 %v228, 0.0
    %v238 = vpack.c.bf16 %v234, %v230
    %v239 = vpack.c.bf16 %v235, %v231
    %v240 = vpack.c.bf16 %v236, %v232
    %v241 = vpack.c.bf16 %v237, %v233
    %v242 = vld [vmem:[#allocation7] sm:$0xff]
    %v243 = vld [vmem:[#allocation7 + $0x8] sm:$0xff]
    %v244 = vld [vmem:[#allocation7 + $0x10] sm:$0xff]
    %v245 = vld [vmem:[#allocation7 + $0x18] sm:$0xff]
    %v246 = vld [vmem:[#allocation7 + $0x20] sm:$0xff]
    %v247 = vld [vmem:[#allocation7 + $0x28] sm:$0xff]
    %v248 = vld [vmem:[#allocation7 + $0x30] sm:$0xff]
    %v249 = vld [vmem:[#allocation7 + $0x38] sm:$0xff]
    %v250 = vld [vmem:[#allocation7 + $0x40] sm:$0xff]
    %v251 = vld [vmem:[#allocation7 + $0x48] sm:$0xff]
    %v252 = vld [vmem:[#allocation7 + $0x50] sm:$0xff]
    %v253 = vld [vmem:[#allocation7 + $0x58] sm:$0xff]
    %v254 = vld [vmem:[#allocation7 + $0x60] sm:$0xff]
    %v255 = vld [vmem:[#allocation7 + $0x68] sm:$0xff]
    %v256 = vld [vmem:[#allocation7 + $0x70] sm:$0xff]
    %v257 = vld [vmem:[#allocation7 + $0x78] sm:$0xff]
    %v258 = vld [vmem:[#allocation7 + $0x80] sm:$0xff]
    %v259 = vld [vmem:[#allocation7 + $0x88] sm:$0xff]
    %v260 = vld [vmem:[#allocation7 + $0x90] sm:$0xff]
    %v261 = vld [vmem:[#allocation7 + $0x98] sm:$0xff]
    %v262 = vld [vmem:[#allocation7 + $0xa0] sm:$0xff]
    %v263 = vld [vmem:[#allocation7 + $0xa8] sm:$0xff]
    %v264 = vld [vmem:[#allocation7 + $0xb0] sm:$0xff]
    %v265 = vld [vmem:[#allocation7 + $0xb8] sm:$0xff]
    %v266 = vld [vmem:[#allocation7 + $0xc0] sm:$0xff]
    %v267 = vld [vmem:[#allocation7 + $0xc8] sm:$0xff]
    %v268 = vld [vmem:[#allocation7 + $0xd0] sm:$0xff]
    %v269 = vld [vmem:[#allocation7 + $0xd8] sm:$0xff]
    %v270 = vld [vmem:[#allocation7 + $0xe0] sm:$0xff]
    %v271 = vld [vmem:[#allocation7 + $0xe8] sm:$0xff]
    %v272 = vld [vmem:[#allocation7 + $0xf0] sm:$0xff]
    %v273 = vld [vmem:[#allocation7 + $0xf8] sm:$0xff]
    %v274 = vld [vmem:[#allocation7 + $0x100] sm:$0xff]
    %v275 = vld [vmem:[#allocation7 + $0x108] sm:$0xff]
    %v276 = vld [vmem:[#allocation7 + $0x110] sm:$0xff]
    %v277 = vld [vmem:[#allocation7 + $0x118] sm:$0xff]
    %v278 = vld [vmem:[#allocation7 + $0x120] sm:$0xff]
    %v279 = vld [vmem:[#allocation7 + $0x128] sm:$0xff]
    %v280 = vld [vmem:[#allocation7 + $0x130] sm:$0xff]
    %v281 = vld [vmem:[#allocation7 + $0x138] sm:$0xff]
    %v282 = vld [vmem:[#allocation7 + $0x140] sm:$0xff]
    %v283 = vld [vmem:[#allocation7 + $0x148] sm:$0xff]
    %v284 = vld [vmem:[#allocation7 + $0x150] sm:$0xff]
    %v285 = vld [vmem:[#allocation7 + $0x158] sm:$0xff]
    %v286 = vld [vmem:[#allocation7 + $0x160] sm:$0xff]
    %v287 = vld [vmem:[#allocation7 + $0x168] sm:$0xff]
    %v288 = vld [vmem:[#allocation7 + $0x170] sm:$0xff]
    %v289 = vld [vmem:[#allocation7 + $0x178] sm:$0xff]
    %v290 = vld [vmem:[#allocation7 + $0x180] sm:$0xff]
    %v291 = vld [vmem:[#allocation7 + $0x188] sm:$0xff]
    %v292 = vld [vmem:[#allocation7 + $0x190] sm:$0xff]
    %v293 = vld [vmem:[#allocation7 + $0x198] sm:$0xff]
    %v294 = vld [vmem:[#allocation7 + $0x1a0] sm:$0xff]
    %v295 = vld [vmem:[#allocation7 + $0x1a8] sm:$0xff]
    %v296 = vld [vmem:[#allocation7 + $0x1b0] sm:$0xff]
    %v297 = vld [vmem:[#allocation7 + $0x1b8] sm:$0xff]
    %v298 = vld [vmem:[#allocation7 + $0x1c0] sm:$0xff]
    %v299 = vld [vmem:[#allocation7 + $0x1c8] sm:$0xff]
    %v300 = vld [vmem:[#allocation7 + $0x1d0] sm:$0xff]
    %v301 = vld [vmem:[#allocation7 + $0x1d8] sm:$0xff]
    %v302 = vld [vmem:[#allocation7 + $0x1e0] sm:$0xff]
    %v303 = vld [vmem:[#allocation7 + $0x1e8] sm:$0xff]
    %v304 = vld [vmem:[#allocation7 + $0x1f0] sm:$0xff]
    %v305 = vld [vmem:[#allocation7 + $0x1f8] sm:$0xff]
    %v306 = vld [vmem:[%s4] sm:$0x3]
    %v308 = vlaneseq
    %v309 = vshrl.u32 %v308, 7
    %v310 = vsub.s32 0, %v309
    %v311 = vrot.slane %v306, %v310
    %v312 = vlaneseq
    %v313 = vshrl.u32 %v312, 7
    %v314 = vsub.s32 1, %v313
    %v315 = vrot.slane %v306, %v314
    %v382 = vunpack.c.l.b16 %v242
    %v383 = vunpack.c.h.b16 %v242
    %v384 = vunpack.c.l.b16 %v243
    %v385 = vunpack.c.h.b16 %v243
    %v386 = vunpack.c.l.b16 %v244
    %v387 = vunpack.c.h.b16 %v244
    %v388 = vunpack.c.l.b16 %v245
    %v389 = vunpack.c.h.b16 %v245
    %v390 = vunpack.c.l.b16 %v246
    %v391 = vunpack.c.h.b16 %v246
    %v392 = vunpack.c.l.b16 %v247
    %v393 = vunpack.c.h.b16 %v247
    %v394 = vunpack.c.l.b16 %v248
    %v395 = vunpack.c.h.b16 %v248
    %v396 = vunpack.c.l.b16 %v249
    %v397 = vunpack.c.h.b16 %v249
    %v398 = vunpack.c.l.b16 %v250
    %v399 = vunpack.c.h.b16 %v250
    %v400 = vunpack.c.l.b16 %v251
    %v401 = vunpack.c.h.b16 %v251
    %v402 = vunpack.c.l.b16 %v252
    %v403 = vunpack.c.h.b16 %v252
    %v404 = vunpack.c.l.b16 %v253
    %v405 = vunpack.c.h.b16 %v253
    %v406 = vunpack.c.l.b16 %v254
    %v407 = vunpack.c.h.b16 %v254
    %v408 = vunpack.c.l.b16 %v255
    %v409 = vunpack.c.h.b16 %v255
    %v410 = vunpack.c.l.b16 %v256
    %v411 = vunpack.c.h.b16 %v256
    %v412 = vunpack.c.l.b16 %v257
    %v413 = vunpack.c.h.b16 %v257
    %v414 = vunpack.c.l.b16 %v258
    %v415 = vunpack.c.h.b16 %v258
    %v416 = vunpack.c.l.b16 %v259
    %v417 = vunpack.c.h.b16 %v259
    %v418 = vunpack.c.l.b16 %v260
    %v419 = vunpack.c.h.b16 %v260
    %v420 = vunpack.c.l.b16 %v261
    %v421 = vunpack.c.h.b16 %v261
    %v422 = vunpack.c.l.b16 %v262
    %v423 = vunpack.c.h.b16 %v262
    %v424 = vunpack.c.l.b16 %v263
    %v425 = vunpack.c.h.b16 %v263
    %v426 = vunpack.c.l.b16 %v264
    %v427 = vunpack.c.h.b16 %v264
    %v428 = vunpack.c.l.b16 %v265
    %v429 = vunpack.c.h.b16 %v265
    %v430 = vunpack.c.l.b16 %v266
    %v431 = vunpack.c.h.b16 %v266
    %v432 = vunpack.c.l.b16 %v267
    %v433 = vunpack.c.h.b16 %v267
    %v434 = vunpack.c.l.b16 %v268
    %v435 = vunpack.c.h.b16 %v268
    %v436 = vunpack.c.l.b16 %v269
    %v437 = vunpack.c.h.b16 %v269
    %v438 = vunpack.c.l.b16 %v270
    %v439 = vunpack.c.h.b16 %v270
    %v440 = vunpack.c.l.b16 %v271
    %v441 = vunpack.c.h.b16 %v271
    %v442 = vunpack.c.l.b16 %v272
    %v443 = vunpack.c.h.b16 %v272
    %v444 = vunpack.c.l.b16 %v273
    %v445 = vunpack.c.h.b16 %v273
    %v446 = vunpack.c.l.b16 %v274
    %v447 = vunpack.c.h.b16 %v274
    %v448 = vunpack.c.l.b16 %v275
    %v449 = vunpack.c.h.b16 %v275
    %v450 = vunpack.c.l.b16 %v276
    %v451 = vunpack.c.h.b16 %v276
    %v452 = vunpack.c.l.b16 %v277
    %v453 = vunpack.c.h.b16 %v277
    %v454 = vunpack.c.l.b16 %v278
    %v455 = vunpack.c.h.b16 %v278
    %v456 = vunpack.c.l.b16 %v279
    %v457 = vunpack.c.h.b16 %v279
    %v458 = vunpack.c.l.b16 %v280
    %v459 = vunpack.c.h.b16 %v280
    %v460 = vunpack.c.l.b16 %v281
    %v461 = vunpack.c.h.b16 %v281
    %v462 = vunpack.c.l.b16 %v282
    %v463 = vunpack.c.h.b16 %v282
    %v464 = vunpack.c.l.b16 %v283
    %v465 = vunpack.c.h.b16 %v283
    %v466 = vunpack.c.l.b16 %v284
    %v467 = vunpack.c.h.b16 %v284
    %v468 = vunpack.c.l.b16 %v285
    %v469 = vunpack.c.h.b16 %v285
    %v470 = vunpack.c.l.b16 %v286
    %v471 = vunpack.c.h.b16 %v286
    %v472 = vunpack.c.l.b16 %v287
    %v473 = vunpack.c.h.b16 %v287
    %v474 = vunpack.c.l.b16 %v288
    %v475 = vunpack.c.h.b16 %v288
    %v476 = vunpack.c.l.b16 %v289
    %v477 = vunpack.c.h.b16 %v289
    %v478 = vunpack.c.l.b16 %v290
    %v479 = vunpack.c.h.b16 %v290
    %v480 = vunpack.c.l.b16 %v291
    %v481 = vunpack.c.h.b16 %v291
    %v482 = vunpack.c.l.b16 %v292
    %v483 = vunpack.c.h.b16 %v292
    %v484 = vunpack.c.l.b16 %v293
    %v485 = vunpack.c.h.b16 %v293
    %v486 = vunpack.c.l.b16 %v294
    %v487 = vunpack.c.h.b16 %v294
    %v488 = vunpack.c.l.b16 %v295
    %v489 = vunpack.c.h.b16 %v295
    %v490 = vunpack.c.l.b16 %v296
    %v491 = vunpack.c.h.b16 %v296
    %v492 = vunpack.c.l.b16 %v297
    %v493 = vunpack.c.h.b16 %v297
    %v494 = vunpack.c.l.b16 %v298
    %v495 = vunpack.c.h.b16 %v298
    %v496 = vunpack.c.l.b16 %v299
    %v497 = vunpack.c.h.b16 %v299
    %v498 = vunpack.c.l.b16 %v300
    %v499 = vunpack.c.h.b16 %v300
    %v500 = vunpack.c.l.b16 %v301
    %v501 = vunpack.c.h.b16 %v301
    %v502 = vunpack.c.l.b16 %v302
    %v503 = vunpack.c.h.b16 %v302
    %v504 = vunpack.c.l.b16 %v303
    %v505 = vunpack.c.h.b16 %v303
    %v506 = vunpack.c.l.b16 %v304
    %v507 = vunpack.c.h.b16 %v304
    %v508 = vunpack.c.l.b16 %v305
    %v509 = vunpack.c.h.b16 %v305
    %v510 = vpack.c.b16 %v384, %v382
    %v511 = vpack.c.b16 %v385, %v383
    %v512 = vpack.c.b16 %v388, %v386
    %v513 = vpack.c.b16 %v389, %v387
    %v514 = vpack.c.b16 %v392, %v390
    %v515 = vpack.c.b16 %v393, %v391
    %v516 = vpack.c.b16 %v396, %v394
    %v517 = vpack.c.b16 %v397, %v395
    %v518 = vpack.c.b16 %v400, %v398
    %v519 = vpack.c.b16 %v401, %v399
    %v520 = vpack.c.b16 %v404, %v402
    %v521 = vpack.c.b16 %v405, %v403
    %v522 = vpack.c.b16 %v408, %v406
    %v523 = vpack.c.b16 %v409, %v407
    %v524 = vpack.c.b16 %v412, %v410
    %v525 = vpack.c.b16 %v413, %v411
    %v526 = vpack.c.b16 %v416, %v414
    %v527 = vpack.c.b16 %v417, %v415
    %v528 = vpack.c.b16 %v420, %v418
    %v529 = vpack.c.b16 %v421, %v419
    %v530 = vpack.c.b16 %v424, %v422
    %v531 = vpack.c.b16 %v425, %v423
    %v532 = vpack.c.b16 %v428, %v426
    %v533 = vpack.c.b16 %v429, %v427
    %v534 = vpack.c.b16 %v432, %v430
    %v535 = vpack.c.b16 %v433, %v431
    %v536 = vpack.c.b16 %v436, %v434
    %v537 = vpack.c.b16 %v437, %v435
    %v538 = vpack.c.b16 %v440, %v438
    %v539 = vpack.c.b16 %v441, %v439
    %v540 = vpack.c.b16 %v444, %v442
    %v541 = vpack.c.b16 %v445, %v443
    %v542 = vpack.c.b16 %v448, %v446
    %v543 = vpack.c.b16 %v449, %v447
    %v544 = vpack.c.b16 %v452, %v450
    %v545 = vpack.c.b16 %v453, %v451
    %v546 = vpack.c.b16 %v456, %v454
    %v547 = vpack.c.b16 %v457, %v455
    %v548 = vpack.c.b16 %v460, %v458
    %v549 = vpack.c.b16 %v461, %v459
    %v550 = vpack.c.b16 %v464, %v462
    %v551 = vpack.c.b16 %v465, %v463
    %v552 = vpack.c.b16 %v468, %v466
    %v553 = vpack.c.b16 %v469, %v467
    %v554 = vpack.c.b16 %v472, %v470
    %v555 = vpack.c.b16 %v473, %v471
    %v556 = vpack.c.b16 %v476, %v474
    %v557 = vpack.c.b16 %v477, %v475
    %v558 = vpack.c.b16 %v480, %v478
    %v559 = vpack.c.b16 %v481, %v479
    %v560 = vpack.c.b16 %v484, %v482
    %v561 = vpack.c.b16 %v485, %v483
    %v562 = vpack.c.b16 %v488, %v486
    %v563 = vpack.c.b16 %v489, %v487
    %v564 = vpack.c.b16 %v492, %v490
    %v565 = vpack.c.b16 %v493, %v491
    %v566 = vpack.c.b16 %v496, %v494
    %v567 = vpack.c.b16 %v497, %v495
    %v568 = vpack.c.b16 %v500, %v498
    %v569 = vpack.c.b16 %v501, %v499
    %v570 = vpack.c.b16 %v504, %v502
    %v571 = vpack.c.b16 %v505, %v503
    %v572 = vpack.c.b16 %v508, %v506
    %v573 = vpack.c.b16 %v509, %v507
    %638 = vmatprep.subr.bf16.mxu0 %v511
    %639 = vmatpush1.bf16.msra.mxu0 %v510
    %640 = vmatprep.subr.bf16.mxu0 %v513
    %641 = vmatpush1.bf16.msra.mxu0 %v512
    %642 = vmatprep.subr.bf16.mxu0 %v515
    %643 = vmatpush1.bf16.msra.mxu0 %v514
    %644 = vmatprep.subr.bf16.mxu0 %v517
    %645 = vmatpush1.bf16.msra.mxu0 %v516
    %646 = vmatprep.subr.bf16.mxu0 %v519
    %647 = vmatpush1.bf16.msra.mxu0 %v518
    %648 = vmatprep.subr.bf16.mxu0 %v521
    %649 = vmatpush1.bf16.msra.mxu0 %v520
    %650 = vmatprep.subr.bf16.mxu0 %v523
    %651 = vmatpush1.bf16.msra.mxu0 %v522
    %652 = vmatprep.subr.bf16.mxu0 %v525
    %653 = vmatpush1.bf16.msra.mxu0 %v524
    %654 = vmatprep.subr.bf16.mxu0 %v527
    %655 = vmatpush1.bf16.msra.mxu0 %v526
    %656 = vmatprep.subr.bf16.mxu0 %v529
    %657 = vmatpush1.bf16.msra.mxu0 %v528
    %658 = vmatprep.subr.bf16.mxu0 %v531
    %659 = vmatpush1.bf16.msra.mxu0 %v530
    %660 = vmatprep.subr.bf16.mxu0 %v533
    %661 = vmatpush1.bf16.msra.mxu0 %v532
    %662 = vmatprep.subr.bf16.mxu0 %v535
    %663 = vmatpush1.bf16.msra.mxu0 %v534
    %664 = vmatprep.subr.bf16.mxu0 %v537
    %665 = vmatpush1.bf16.msra.mxu0 %v536
    %666 = vmatprep.subr.bf16.mxu0 %v539
    %667 = vmatpush1.bf16.msra.mxu0 %v538
    %668 = vmatprep.subr.bf16.mxu0 %v541
    %669 = vmatpush1.bf16.msra.mxu0 %v540
    %670 = vmatprep.mubr.bf16.mxu0 %v239
    %671 = vmatmul.mubr.bf16.gmra.mrb[0].mxu0 %v238
    %v672 = vpop.f32.mrb[0].mxu0
    %v673 = vadd.f32 %v311, %v672
    %v674 = vpop.f32.mrb[0].mxu0
    %v675 = vadd.f32 %v315, %v674
    %v676 = vpop.f32.mrb[0].mxu0
    %v677 = vadd.f32 %v311, %v676
    %v678 = vpop.f32.mrb[0].mxu0
    %v679 = vadd.f32 %v315, %v678
    %680 = vdwg.mxu0
    %681 = vmatprep.subr.bf16.mxu0 %v543
    %682 = vmatpush1.bf16.msra.mxu0 %v542
    %683 = vmatprep.subr.bf16.mxu0 %v545
    %684 = vmatpush1.bf16.msra.mxu0 %v544
    %685 = vmatprep.subr.bf16.mxu0 %v547
    %686 = vmatpush1.bf16.msra.mxu0 %v546
    %687 = vmatprep.subr.bf16.mxu0 %v549
    %688 = vmatpush1.bf16.msra.mxu0 %v548
    %689 = vmatprep.subr.bf16.mxu0 %v551
    %690 = vmatpush1.bf16.msra.mxu0 %v550
    %691 = vmatprep.subr.bf16.mxu0 %v553
    %692 = vmatpush1.bf16.msra.mxu0 %v552
    %693 = vmatprep.subr.bf16.mxu0 %v555
    %694 = vmatpush1.bf16.msra.mxu0 %v554
    %695 = vmatprep.subr.bf16.mxu0 %v557
    %696 = vmatpush1.bf16.msra.mxu0 %v556
    %697 = vmatprep.subr.bf16.mxu0 %v559
    %698 = vmatpush1.bf16.msra.mxu0 %v558
    %699 = vmatprep.subr.bf16.mxu0 %v561
    %700 = vmatpush1.bf16.msra.mxu0 %v560
    %701 = vmatprep.subr.bf16.mxu0 %v563
    %702 = vmatpush1.bf16.msra.mxu0 %v562
    %703 = vmatprep.subr.bf16.mxu0 %v565
    %704 = vmatpush1.bf16.msra.mxu0 %v564
    %705 = vmatprep.subr.bf16.mxu0 %v567
    %706 = vmatpush1.bf16.msra.mxu0 %v566
    %707 = vmatprep.subr.bf16.mxu0 %v569
    %708 = vmatpush1.bf16.msra.mxu0 %v568
    %709 = vmatprep.subr.bf16.mxu0 %v571
    %710 = vmatpush1.bf16.msra.mxu0 %v570
    %711 = vmatprep.subr.bf16.mxu0 %v573
    %712 = vmatpush1.bf16.msra.mxu0 %v572
    %713 = vmatprep.mubr.bf16.mxu0 %v241
    %714 = vmatmul.mubr.bf16.gmra.mrb[0].mxu0 %v240
    %v715 = vpop.f32.mrb[0].mxu0
    %v716 = vadd.f32 %v673, %v715
    %v717 = vpop.f32.mrb[0].mxu0
    %v718 = vadd.f32 %v675, %v717
    %v719 = vpop.f32.mrb[0].mxu0
    %v720 = vadd.f32 %v677, %v719
    %v721 = vpop.f32.mrb[0].mxu0
    %v722 = vadd.f32 %v679, %v721
    %723 = vdwg.mxu0
    %724 = vmax.xlane.f32.xlu0 %v716
    %v725 = vpop.xlane.xlu0 %724
    %726 = vmax.xlane.f32.xlu0 %v720
    %v727 = vpop.xlane.xlu0 %726
    %v728 = vsub.f32 %v716, %v725
    %v729 = vsub.f32 %v720, %v727
    %v730 = vmul.f32 %v728, 1.442695
    %v731 = vpow.pop %v730
    %v732 = vmul.f32 %v729, 1.442695
    %v733 = vpow.pop %v732
    %734 = vadd.xlane.f32.xlu0 %v731
    %v735 = vpop.xlane.xlu0 %734
    %736 = vadd.xlane.f32.xlu0 %v733
    %v737 = vpop.xlane.xlu0 %736
    %v738 = vlog2.pop %v735
    %v739 = vmul.f32 %v738, 0.6931472
    %v740 = vlog2.pop %v737
    %v741 = vmul.f32 %v740, 0.6931472
    %v742 = vadd.f32 %v725, %v739
    %v743 = vadd.f32 %v727, %v741
    %v744 = vsub.f32 %v716, %v742
    %v745 = vsub.f32 %v720, %v743
    %746 = vst [vmem:[#allocation8] sm:$0xff] %v744
    %747 = vst [vmem:[#allocation8 + $0x10] sm:$0xff] %v745
    %748 = vmax.xlane.f32.xlu0 %v718
    %v749 = vpop.xlane.xlu0 %748
    %750 = vmax.xlane.f32.xlu0 %v722
    %v751 = vpop.xlane.xlu0 %750
    %v752 = vsub.f32 %v718, %v749
    %v753 = vsub.f32 %v722, %v751
    %v754 = vmul.f32 %v752, 1.442695
    %v755 = vpow.pop %v754
    %v756 = vmul.f32 %v753, 1.442695
    %v757 = vpow.pop %v756
    %758 = vadd.xlane.f32.xlu0 %v755
    %v759 = vpop.xlane.xlu0 %758
    %760 = vadd.xlane.f32.xlu0 %v757
    %v761 = vpop.xlane.xlu0 %760
    %v762 = vlog2.pop %v759
    %v763 = vmul.f32 %v762, 0.6931472
    %v764 = vlog2.pop %v761
    %v765 = vmul.f32 %v764, 0.6931472
    %v766 = vadd.f32 %v749, %v763
    %v767 = vadd.f32 %v751, %v765
    %v768 = vsub.f32 %v718, %v766
    %v769 = vsub.f32 %v722, %v767
    %770 = vst [vmem:[#allocation8 + $0x8] sm:$0xff] %v768
    %771 = vst [vmem:[#allocation8 + $0x18] sm:$0xff] %v769
    // Predicated region
    $region34: #{tpu_custom_call.1} parent=1 // pred_check
      _
    $region35: #{tpu_custom_call.1} parent=1 // pred_check_branch
      %773 = sbr.rel (0) target = $region37
    $region36: #{tpu_custom_call.1} parent=1 // pred_region
      %s775 = ssub.s32 512, 512
      %776 = vsyncadd [#allocation4], %s775
      %s777 = sshll.u32 [#allocation8], 4
      %s778 = int_to_ptr.vmem [resolvable:$true] %s777
      %783 = dma.vmem_to_hbm [thread:$0]  %s778, 512, %s5, [#allocation4], 256, 256, 16
    $region37: #{tpu_custom_call.1} parent=1 // pred_fallthru
      _
    // Predicated region
    $region38: #{tpu_custom_call.1} parent=1 // pred_check
      _
    $region39: #{tpu_custom_call.1} parent=1 // pred_check_branch
      %785 = sbr.rel (0) target = $region41
    $region40: #{tpu_custom_call.1} parent=1 // pred_region
      %786 = dma.done [#allocation4], 512
    $region41: #{tpu_custom_call.1} parent=1 // pred_fallthru
      _
    %787 = vsyncpa [#allocation3], 1
    %788 = vsyncpa [#allocation6], 1
    %789 = vsyncpa [#allocation4], 1

</llo_original>
